<compile_context>
chip_gen: v6e
topology: v6e:2x2x1
jax: 0.10.0
libtpu: 0.0.40
codegen_flags: <defaults>
</compile_context>

<pallas_src>
import jax
import jax.numpy as jnp
from jax.experimental import pallas as pl
from jax.experimental.pallas import tpu as pltpu


# ----------------------------- Pallas kernel --------------------------------

def _make_invconv_kernel(compute_dtype):
    def kernel(w_ref, x_ref, mask_ref, o_ref):
        # w_ref   : (C, C)      expanded channel-mixing matrix (compute_dtype, VMEM-resident)
        # x_ref   : (1, C, TT)  one (batch, t-tile) block of the input, original layout
        # mask_ref: (1, 1, TT)  per-timestep mask (f32) for the same tile
        # o_ref   : (1, C, TT)  output in the activation dtype
        x = x_ref[0].astype(compute_dtype)                # (C, TT) VPU cast (no-op if same dtype)
        y = jnp.dot(w_ref[...], x,
                    preferred_element_type=jnp.float32)   # MXU matmul, f32 accumulation
        o_ref[0] = (y * mask_ref[0]).astype(o_ref.dtype)  # f32 mask math on the VPU
    return kernel


# ----------------------------- tiling / VMEM plan ----------------------------

def _round_up(x, m):
    return ((x + m - 1) // m) * m


def _vmem_budget_bytes():
    """Generation-aware per-step VMEM budget plus physical capacity."""
    try:
        cap = int(pltpu.get_tpu_info().vmem_capacity_bytes)
    except Exception:
        cap = 64 * 1024 * 1024          # conservative fallback: v7x per-TensorCore physical
    if cap <= 64 * 1024 * 1024:         # v7x: 64 MiB physical per TC -> stay <= ~20 MiB
        budget = 20 * 1024 * 1024
    else:                               # v5e/v6e: 128 MiB physical -> ~24 MiB is plenty;
        budget = 24 * 1024 * 1024       # tiles beyond 1-2K lanes buy <2%, spend headroom on depth
    return cap, budget


def _plan_tiling(T, C, elt_bytes):
    """Pick (t_tile, deep_buffer, vmem_limit_bytes).

    Per-step working-set model (double-buffered BlockSpec pipeline):
        W (resident, 2x)             : 2 * C*C*4
        x + out tiles (2x each)      : 4 * C*TT*elt
        f32 dot + masked temporaries : 2 * C*TT*4
        mask tiles                   : ~2 * TT*4
    """
    cap, budget = _vmem_budget_bytes()
    w_bytes = 2 * C * C * 4
    per_t = 4 * C * elt_bytes + 2 * C * 4 + 8

    min_ws = w_bytes + per_t * min(T, 128)
    if min_ws > budget:
        # TODO(synk): for very large C (Q >> 64) switch to a grouped/block-diagonal
        # formulation instead of the dense (C, C) expansion.
        raise ValueError(
            f"InvConvNear Pallas kernel: expanded (C={C}) weight plus a minimal 128-lane "
            f"tile needs ~{min_ws >> 20} MiB VMEM, exceeding the {budget >> 20} MiB budget.")

    if T <= 128:
        t_tile = T                      # wrapper pads T<128 up to 128 (lane-dense stores)
    else:
        cap_budget = max(128, ((budget - w_bytes) // per_t) // 128 * 128)
        cap_grain = max(128, _round_up(-(-T // 4), 128))   # aim for >= 4 T blocks
        t_tile = max(128, min(2048, cap_budget, cap_grain))

    nt = -(-T // t_tile)
    est2 = w_bytes + per_t * t_tile                 # 2-deep pipeline
    est3 = est2 + C * t_tile * elt_bytes            # + one extra x buffer (Buffered(3))
    deep = (nt >= 4) and (est3 <= budget)
    est = est3 if deep else est2
    vmem_limit = int(min(cap * 3 // 4, max(32 * 1024 * 1024, 2 * est)))
    return t_tile, deep, vmem_limit


# ------------------------------- pallas_call ---------------------------------

def _run_invconv(w, seq, mask_f32, compute_dtype):
    """w: (C, C) compute_dtype, seq: (B, C, T), mask_f32: (B, 1, T) -> (B, C, T) in seq.dtype."""
    B, C, T = seq.shape
    elt_bytes = jnp.dtype(seq.dtype).itemsize
    t_tile, deep, vmem_limit = _plan_tiling(T, C, elt_bytes)
    nt = pl.cdiv(T, t_tile)

    x_spec = pl.BlockSpec((1, C, t_tile), lambda b, t: (b, 0, t))
    if deep and hasattr(pl, "Buffered"):
        try:
            x_spec = pl.BlockSpec((1, C, t_tile), lambda b, t: (b, 0, t),
                                  pipeline_mode=pl.Buffered(3))
        except TypeError:
            pass  # older jax: fall back to default 2-deep buffering

    return pl.pallas_call(
        _make_invconv_kernel(compute_dtype),
        out_shape=jax.ShapeDtypeStruct((B, C, T), seq.dtype),
        grid_spec=pltpu.PrefetchScalarGridSpec(
            num_scalar_prefetch=0,
            grid=(B, nt),
            in_specs=[
                pl.BlockSpec((C, C), lambda b, t: (0, 0)),            # weight: fetched once, resident
                x_spec,
                pl.BlockSpec((1, 1, t_tile), lambda b, t: (b, 0, t)),
            ],
            out_specs=pl.BlockSpec((1, C, t_tile), lambda b, t: (b, 0, t)),
        ),
        compiler_params=pltpu.CompilerParams(
            dimension_semantics=("parallel", "parallel"),
            vmem_limit_bytes=vmem_limit),
    )(w, seq, mask_f32)


# ------------------------ parameter / matrix helpers --------------------------

def init_inv_conv_near_params(key, in_channels, num_splits):
    assert in_channels % num_splits == 0
    assert num_splits % 2 == 0
    normal = jax.random.normal(key, (num_splits, num_splits), dtype=jnp.float32)
    matrix, _ = jnp.linalg.qr(normal)
    det = jnp.linalg.det(matrix)
    matrix = matrix.at[:, 0].multiply(jnp.where(det < 0.0, -1.0, 1.0))
    return matrix


def prepare_inverse(matrix):
    """Mirror of InvConvNear.prepare_for_inference: cache the inverse once."""
    return jnp.linalg.inv(matrix)


def _expand_matrix(mat, C, S):
    """Expand the (S, S) mixing matrix into the equivalent block-structured (C, C)
    matrix that already includes the group/ungroup channel permutation:
        W[c_out, c_in] = mat[s(c_out), s(c_in)] * [q(c_out) == q(c_in)]
    with s(c) = (c // (Q*H)) * H + (c % H), q(c) = (c % (Q*H)) // H,
    Q = C // S, H = S // 2.  Only 1/Q of W is nonzero (Q x the algorithmic FLOPs
    on the MXU); for Glow-TTS channel counts this keeps the kernel HBM-bound."""
    Q = C // S
    H = S // 2
    c = jnp.arange(C)
    a = c // (Q * H)
    rem = c % (Q * H)
    q = rem // H
    h = rem % H
    s = a * H + h
    same_group = (q[:, None] == q[None, :]).astype(mat.dtype)
    return mat[s[:, None], s[None, :]] * same_group


# --------------------------------- forward ------------------------------------

def inv_conv_near_forward(matrix, seq, mask, *, num_splits, reverse=False,
                          inv_matrix=None, compute_dtype=None):
    """
    seq : (B, C, T) float32 or bfloat16 (output follows seq.dtype)
    mask: (B, 1, T)
    compute_dtype: MXU operand dtype; None -> bf16 if seq is bf16 else f32.
                   Pass jnp.bfloat16 explicitly on v5e to stay memory-bound.
    returns (out (B, C, T), logdet (B,) or None)
    """
    B, C, T = seq.shape
    S = num_splits
    assert C % S == 0 and S % 2 == 0
    Q = C // S

    if not reverse:
        mat = matrix
        lengths = jnp.sum(mask, axis=(1, 2))                    # (B,)
        sign, logabsdet = jnp.linalg.slogdet(matrix)
        logdet_m = jnp.where(sign > 0, logabsdet, jnp.nan)      # torch.logdet semantics
        logdet = logdet_m * Q * lengths
    else:
        # Prefer a cached inverse (prepare_inverse); fall back to inverting here.
        mat = inv_matrix if inv_matrix is not None else jnp.linalg.inv(matrix)
        logdet = None

    if compute_dtype is None:
        compute_dtype = jnp.bfloat16 if seq.dtype == jnp.bfloat16 else jnp.float32

    w = _expand_matrix(mat.astype(jnp.float32), C, S).astype(compute_dtype)  # (C, C), tiny
    mask_f32 = mask.astype(jnp.float32)

    # Pad very short sequences to a full 128-lane tile so output stores are
    # lane-dense (avoids masked vst.msk partial stores); sliced back below.
    T_orig = T
    if T < 128:
        pad = 128 - T
        seq = jnp.pad(seq, ((0, 0), (0, 0), (0, pad)))
        mask_f32 = jnp.pad(mask_f32, ((0, 0), (0, 0), (0, pad)))

    out = _run_invconv(w, seq, mask_f32, compute_dtype)
    if T_orig != out.shape[-1]:
        out = out[:, :, :T_orig]
    return out, logdet


# -------------------------------- reference -----------------------------------

def _reference_forward(matrix, seq, mask, *, num_splits):
    """Pure-JAX reference mirroring the PyTorch module exactly."""
    B, C, T = seq.shape
    S = num_splits
    Q = C // S
    x = seq.astype(jnp.float32).reshape(B, 2, Q, S // 2, T)
    x = jnp.transpose(x, (0, 1, 3, 2, 4)).reshape(B, S, Q, T)
    z = jnp.einsum("oi,biqt->boqt", matrix, x)
    z = z.reshape(B, 2, S // 2, Q, T)
    z = jnp.transpose(z, (0, 1, 3, 2, 4)).reshape(B, C, T)
    z = z * mask
    lengths = jnp.sum(mask, axis=(1, 2))
    sign, logabsdet = jnp.linalg.slogdet(matrix)
    logdet = jnp.where(sign > 0, logabsdet, jnp.nan) * Q * lengths
    return z, logdet


if __name__ == "__main__":
    key = jax.random.PRNGKey(0)
    k_mat, k_seq, k_seq2 = jax.random.split(key, 3)

    # ---------- small shapes (exercises the T<128 lane-padding path) ----------
    B, C, T, S = 2, 8, 16, 4
    matrix = init_inv_conv_near_params(k_mat, C, S)
    seq = jax.random.normal(k_seq, (B, C, T), dtype=jnp.float32)
    lens = jnp.array([T, T - 5], dtype=jnp.int32)
    mask = (jnp.arange(T)[None, None, :] < lens[:, None, None]).astype(jnp.float32)

    out, logdet = inv_conv_near_forward(matrix, seq, mask, num_splits=S)
    out, logdet = jax.block_until_ready((out, logdet))
    ref_out, ref_logdet = _reference_forward(matrix, seq, mask, num_splits=S)
    # tolerances allow for MXU bf16-pass default matmul precision on either side
    assert jnp.allclose(out, ref_out, atol=2e-2, rtol=2e-2), "small f32 forward mismatch"
    assert jnp.allclose(logdet, ref_logdet, atol=1e-4, rtol=1e-4), "logdet mismatch"

    # reverse path with cached inverse: should reconstruct seq * mask
    inv = prepare_inverse(matrix)
    rec, _ = inv_conv_near_forward(matrix, out, mask, num_splits=S,
                                   reverse=True, inv_matrix=inv)
    rec = jax.block_until_ready(rec)
    assert jnp.allclose(rec, seq * mask, atol=1e-1, rtol=1e-1), "reverse mismatch"

    # bf16-activation path (halves streamed HBM bytes; f32 accumulation inside)
    out_bf16, _ = inv_conv_near_forward(matrix, seq.astype(jnp.bfloat16), mask,
                                        num_splits=S)
    out_bf16 = jax.block_until_ready(out_bf16)
    assert out_bf16.dtype == jnp.bfloat16
    assert jnp.allclose(out_bf16.astype(jnp.float32), ref_out, atol=1e-1, rtol=1e-1), \
        "bf16 forward mismatch"

    # -------- realistic Glow-TTS-ish shapes (multi T-block grid, deep buffering) --------
    B2, C2, T2 = 1, 192, 4096
    matrix2 = init_inv_conv_near_params(k_mat, C2, S)
    seq2 = jax.random.normal(k_seq2, (B2, C2, T2), dtype=jnp.float32)
    mask2 = (jnp.arange(T2)[None, None, :] < 3000).astype(jnp.float32)
    out2, logdet2 = inv_conv_near_forward(matrix2, seq2, mask2, num_splits=S)
    out2, logdet2 = jax.block_until_ready((out2, logdet2))
    ref_out2, ref_logdet2 = _reference_forward(matrix2, seq2, mask2, num_splits=S)
    assert jnp.allclose(out2, ref_out2, atol=2e-2, rtol=2e-2), "large f32 forward mismatch"
    assert jnp.allclose(logdet2, ref_logdet2, atol=5e-2, rtol=1e-3), "large logdet mismatch"

    print("KERNEL_OK")
</pallas_src>

<mosaic_0001>
module attributes {stable_mosaic.version = 11 : i64} {
  func.func @kernel(%arg0: i32, %arg1: i32, %arg2: memref<8x8xf32, #tpu.memory_space<vmem>>, %arg3: memref<1x8x128xf32, #tpu.memory_space<vmem>>, %arg4: memref<1x1x128xf32, #tpu.memory_space<vmem>>, %arg5: memref<1x8x128xf32, #tpu.memory_space<vmem>>) attributes {dimension_semantics = [#tpu.dimension_semantics<parallel>, #tpu.dimension_semantics<parallel>], iteration_bounds = array<i64: 2, 1>, scalar_prefetch = 0 : i64, scratch_operands = 0 : i64, tpu.core_type = #tpu.core_type<tc>, window_params = [{pipeline_mode = #tpu.pipeline_mode<synchronous>, transform_indices = @transform_0, window_bounds = array<i64: 8, 8>}, {transform_indices = @transform_1, window_bounds = array<i64: 1, 8, 128>}, {transform_indices = @transform_2, window_bounds = array<i64: 1, 1, 128>}, {transform_indices = @transform_3, window_bounds = array<i64: 1, 8, 128>}]} {
    %c0 = arith.constant 0 : index
    %c0_0 = arith.constant 0 : index
    %c0_1 = arith.constant 0 : index
    %0 = vector.load %arg3[%c0, %c0_0, %c0_1] : memref<1x8x128xf32, #tpu.memory_space<vmem>>, vector<1x8x128xf32>
    %1 = vector.shape_cast %0 : vector<1x8x128xf32> to vector<8x128xf32>
    %c0_2 = arith.constant 0 : index
    %c0_3 = arith.constant 0 : index
    %2 = vector.load %arg2[%c0_2, %c0_3] : memref<8x8xf32, #tpu.memory_space<vmem>>, vector<8x8xf32>
    %cst = arith.constant dense<0.000000e+00> : vector<8x128xf32>
    %3 = tpu.matmul %2, %1, %cst {dimension_numbers = #tpu.dot_dimension_numbers<[1], [0], [0], [1], [0, 0, 1, 1], [], []>} : vector<8x8xf32>, vector<8x128xf32>, vector<8x128xf32> -> vector<8x128xf32>
    %c0_4 = arith.constant 0 : index
    %c0_5 = arith.constant 0 : index
    %c0_6 = arith.constant 0 : index
    %4 = vector.load %arg4[%c0_4, %c0_5, %c0_6] : memref<1x1x128xf32, #tpu.memory_space<vmem>>, vector<1x1x128xf32>
    %5 = vector.shape_cast %4 : vector<1x1x128xf32> to vector<1x128xf32>
    %6 = vector.broadcast %5 : vector<1x128xf32> to vector<8x128xf32>
    %7 = arith.mulf %3, %6 : vector<8x128xf32>
    %c0_7 = arith.constant 0 : index
    %c0_8 = arith.constant 0 : index
    %c0_9 = arith.constant 0 : index
    %8 = vector.load %arg5[%c0_7, %c0_8, %c0_9] : memref<1x8x128xf32, #tpu.memory_space<vmem>>, vector<1x8x128xf32>
    %9 = vector.shape_cast %8 : vector<1x8x128xf32> to vector<8x128xf32>
    %10 = vector.shape_cast %7 : vector<8x128xf32> to vector<1x8x128xf32>
    tpu.vector_store %arg5[%c0_7, %c0_8, %c0_9], %10 {strides = array<i32>} : memref<1x8x128xf32, #tpu.memory_space<vmem>>, vector<1x8x128xf32>,
    return
  }
  func.func @transform_0(%arg0: i32, %arg1: i32) -> (i32, i32) {
    %c0_i32 = arith.constant 0 : i32
    %c0_i32_0 = arith.constant 0 : i32
    %c0_i32_1 = arith.constant 0 : i32
    return %c0_i32, %c0_i32_0 : i32, i32
  }
  func.func @transform_1(%arg0: i32, %arg1: i32) -> (i32, i32, i32) {
    %c0_i32 = arith.constant 0 : i32
    %c0_i32_0 = arith.constant 0 : i32
    return %arg0, %c0_i32, %arg1 : i32, i32, i32
  }
  func.func @transform_2(%arg0: i32, %arg1: i32) -> (i32, i32, i32) {
    %c0_i32 = arith.constant 0 : i32
    %c0_i32_0 = arith.constant 0 : i32
    return %arg0, %c0_i32, %arg1 : i32, i32, i32
  }
  func.func @transform_3(%arg0: i32, %arg1: i32) -> (i32, i32, i32) {
    %c0_i32 = arith.constant 0 : i32
    %c0_i32_0 = arith.constant 0 : i32
    return %arg0, %c0_i32, %arg1 : i32, i32, i32
  }
}

</mosaic_0001>

<llo_original>
// kernel: tpu_custom_call.1
$region0: #{tpu_custom_call.1}
  #allocation0 [shape = 'u32[]', space=smem, size = 0x4, offset = 0x4, fixed_abs, tag = 'smem constant byte address 0x4 - core index']
  #allocation1 [shape = 'u32[144,128]{1,0:T(1,128)}', space=vmem, size = 0x12000, scoped, tag = 'internal scratch']
  %s0 = inlined_call_operand.hbm [shape: f32[8,8], index: 0, kind: input, shape index: {}]
  %s1 = inlined_call_operand.hbm [shape: f32[2,8,128], index: 1, kind: input, shape index: {}]
  %s2 = inlined_call_operand.vmem [shape: f32[2,1,128], index: 2, kind: input, shape index: {}]
  %s3 = inlined_call_operand.hbm [shape: f32[2,8,128], index: 3, kind: output, shape index: {}]
  %s4 = sld [smem:[#allocation0]]
  $region53: #{tpu_custom_call.1} parent=0
    _
  %s6 = ssub.s32 1, %s4
  %s7 = scalar_select 0, %s6, %s4
  $region1: #{tpu_custom_call.1} parent=0
    #allocation2 [shape = 'u8[4096]{0}', space=vmem, size = 0x1000, scoped, tag = 'input window, operand 0, single buffered']
    #allocation3 [shape = 's32[2]{0}', space=sflag, size = 0x8, scoped, tag = 'scoped memory for tpu_custom_call.1']
    #allocation4 [shape = 's32[2]{0}', space=sflag, size = 0x8, scoped, tag = 'scoped memory for tpu_custom_call.1']
    #allocation5 [shape = 'u8[8192]{0}', space=vmem, size = 0x2000, scoped, tag = 'input window, operand 1']
    #allocation6 [shape = 's32[2]{0}', space=sflag, size = 0x8, scoped, tag = 'scoped memory for tpu_custom_call.1']
    #allocation7 [shape = 'u8[8192]{0}', space=vmem, size = 0x2000, scoped, tag = 'output window, operand 0']
    %8 = vsyncpa [#allocation3], 0
    %9 = vsyncpa [#allocation6], 0
    %s10 = scalar_lea.sflag [#allocation6], 1
    %11 = vsyncpa %s10, 0
    %12 = vsyncpa [#allocation4], 0
    %s13 = scalar_lea.sflag [#allocation4], 1
    %14 = vsyncpa %s13, 0
    loop: start=0, step=1, limit=4
    $region2: #{tpu_custom_call.1} parent=1 // loop_pre_header
      _
    $region3: #{tpu_custom_call.1} parent=1 // loop_header
      %s16 = sphi 0, %s20
      %p17 = scmp.ge.s32.totalorder %s16, 4
      %s23 = sphi 0, %s35
      %s24 = sphi 0, %s31
      %s25 = sphi 0, %s23
      %s26 = sphi 0, %s24
      %s27 = sphi 0, %s25
      %s28 = sphi 0, %s26
      %s36 = sphi 0, %s36
      %s38 = sphi 0, %s36
      %s39 = sphi 0, %s38
      %s53 = sphi 0, %s39
      %s61 = sphi 0, %s63
      %s64 = sphi 0, %s61
      %s65 = sphi 0, %s64
      %s81 = sphi 0, %s65
      %s89 = sphi 0, %s91
      %s92 = sphi 0, %s89
      %s93 = sphi 0, %s92
      %s109 = sphi 0, %s93
      %s117 = sphi 0, %s119
      %s120 = sphi 0, %s117
      %s121 = sphi 0, %s120
      %s137 = sphi 0, %s121
    $region4: #{tpu_custom_call.1} parent=1 // loop_header_branch
      %19 = sbr.rel (%p17) target = $region8
    $region5: #{tpu_custom_call.1} parent=1 // loop_body
      %s21 = ssub.s32 %s16, 1
      %s22 = ssub.s32 %s16, 2
      %s29 = sadd.s32 1, %s24
      %p30 = scmp.ge.s32.totalorder %s29, 1
      %s31 = scalar_select %p30, 0, %s29
      %s32 = sadd.s32 1, %s23
      %s33 = scalar_select %p30, %s32, %s23
      %p34 = scmp.ge.s32.totalorder %s33, 2
      %s35 = scalar_select %p34, 0, %s33
      %s37 = sadd.s32 %s36, 1
      %p40 = scmp.eq.s32.totalorder %s16, 1
      %p41 = scmp.ne.s32.totalorder %s36, %s38
      %p42 = scmp.eq.s32.totalorder %s16, 0
      %p43 = por %p41, %p42
      %p44 = scmp.ne.s32.totalorder %s36, %s38
      %p45 = scmp.eq.s32.totalorder %s21, 1
      %p46 = por %p44, %p45
      %p47 = scmp.ne.s32.totalorder %s38, %s39
      %p48 = scmp.eq.s32.totalorder %s21, 0
      %p49 = por %p47, %p48
      %p50 = scmp.ne.s32.totalorder %s38, %s39
      %p51 = scmp.eq.s32.totalorder %s22, 1
      %p52 = por %p50, %p51
      %p54 = scmp.ne.s32.totalorder %s39, %s53
      %p55 = scmp.eq.s32.totalorder %s22, 0
      %p56 = por %p54, %p55
      %s57 = ssub.s32 %s23, %s35
      %s58 = ssub.s32 %s24, %s31
      %s59 = sor.u32 %s57, %s58
      %p60 = scmp.eq.s32.totalorder %s59, 0
      %s62 = sadd.s32 %s61, 1
      %s63 = scalar_select %p60, %s61, %s62
      %p66 = pneg %p60
      %p67 = scmp.eq.s32.totalorder %s16, 1
      %p68 = por %p66, %p67
      %p69 = scmp.ne.s32.totalorder %s61, %s64
      %p70 = scmp.eq.s32.totalorder %s16, 0
      %p71 = por %p69, %p70
      %p72 = scmp.ne.s32.totalorder %s61, %s64
      %p73 = scmp.eq.s32.totalorder %s21, 1
      %p74 = por %p72, %p73
      %p75 = scmp.ne.s32.totalorder %s64, %s65
      %p76 = scmp.eq.s32.totalorder %s21, 0
      %p77 = por %p75, %p76
      %p78 = scmp.ne.s32.totalorder %s64, %s65
      %p79 = scmp.eq.s32.totalorder %s22, 1
      %p80 = por %p78, %p79
      %p82 = scmp.ne.s32.totalorder %s65, %s81
      %p83 = scmp.eq.s32.totalorder %s22, 0
      %p84 = por %p82, %p83
      %s85 = ssub.s32 %s23, %s35
      %s86 = ssub.s32 %s24, %s31
      %s87 = sor.u32 %s85, %s86
      %p88 = scmp.eq.s32.totalorder %s87, 0
      %s90 = sadd.s32 %s89, 1
      %s91 = scalar_select %p88, %s89, %s90
      %p94 = pneg %p88
      %p95 = scmp.eq.s32.totalorder %s16, 1
      %p96 = por %p94, %p95
      %p97 = scmp.ne.s32.totalorder %s89, %s92
      %p98 = scmp.eq.s32.totalorder %s16, 0
      %p99 = por %p97, %p98
      %p100 = scmp.ne.s32.totalorder %s89, %s92
      %p101 = scmp.eq.s32.totalorder %s21, 1
      %p102 = por %p100, %p101
      %p103 = scmp.ne.s32.totalorder %s92, %s93
      %p104 = scmp.eq.s32.totalorder %s21, 0
      %p105 = por %p103, %p104
      %p106 = scmp.ne.s32.totalorder %s92, %s93
      %p107 = scmp.eq.s32.totalorder %s22, 1
      %p108 = por %p106, %p107
      %p110 = scmp.ne.s32.totalorder %s93, %s109
      %p111 = scmp.eq.s32.totalorder %s22, 0
      %p112 = por %p110, %p111
      %s113 = ssub.s32 %s23, %s35
      %s114 = ssub.s32 %s24, %s31
      %s115 = sor.u32 %s113, %s114
      %p116 = scmp.eq.s32.totalorder %s115, 0
      %s118 = sadd.s32 %s117, 1
      %s119 = scalar_select %p116, %s117, %s118
      %p122 = pneg %p116
      %p123 = scmp.eq.s32.totalorder %s16, 1
      %p124 = por %p122, %p123
      %p125 = scmp.ne.s32.totalorder %s117, %s120
      %p126 = scmp.eq.s32.totalorder %s16, 0
      %p127 = por %p125, %p126
      %p128 = scmp.ne.s32.totalorder %s117, %s120
      %p129 = scmp.eq.s32.totalorder %s21, 1
      %p130 = por %p128, %p129
      %p131 = scmp.ne.s32.totalorder %s120, %s121
      %p132 = scmp.eq.s32.totalorder %s21, 0
      %p133 = por %p131, %p132
      %p134 = scmp.ne.s32.totalorder %s120, %s121
      %p135 = scmp.eq.s32.totalorder %s22, 1
      %p136 = por %p134, %p135
      %p138 = scmp.ne.s32.totalorder %s121, %s137
      %p139 = scmp.eq.s32.totalorder %s22, 0
      %p140 = por %p138, %p139
      %p141 = scmp.le.s32.totalorder 1, %s16
      %p142 = scmp.lt.s32.totalorder %s16, 3
      %p143 = pnand %p141, %p142
      %p144 = pneg %p143
      // Predicated region
      $region9: #{tpu_custom_call.1} parent=5 // pred_check
        _
      $region10: #{tpu_custom_call.1} parent=5 // pred_check_branch
        %146 = sbr.rel (%p143) target = $region12
      $region11: #{tpu_custom_call.1} parent=5 // pred_region
        %s147 = ssub.s32 %s16, 1
        // Predicated region
        $region13: #{tpu_custom_call.1} parent=11 // pred_check
          %p148 = pneg %p49
        $region14: #{tpu_custom_call.1} parent=11 // pred_check_branch
          %150 = sbr.rel (%p148) target = $region16
        $region15: #{tpu_custom_call.1} parent=11 // pred_region
          %s152 = ssub.s32 128, 128
          %153 = vsyncadd [#allocation3], %s152
          %s155 = sshll.u32 [#allocation2], 4
          %s156 = int_to_ptr.vmem [resolvable:$true] %s155
          %158 = dma.hbm_to_vmem [thread:$0]  %s0, 128, %s156, [#allocation3]
        $region16: #{tpu_custom_call.1} parent=11 // pred_fallthru
          _
      $region12: #{tpu_custom_call.1} parent=5 // pred_fallthru
        _
      %p159 = scmp.lt.s32.totalorder %s16, 2
      // Predicated region
      $region17: #{tpu_custom_call.1} parent=5 // pred_check
        %p160 = pneg %p159
      $region18: #{tpu_custom_call.1} parent=5 // pred_check_branch
        %162 = sbr.rel (%p160) target = $region20
      $region19: #{tpu_custom_call.1} parent=5 // pred_region
        // Predicated region
        $region21: #{tpu_custom_call.1} parent=19 // pred_check
          %p163 = pneg %p71
        $region22: #{tpu_custom_call.1} parent=19 // pred_check_branch
          %165 = sbr.rel (%p163) target = $region24
        $region23: #{tpu_custom_call.1} parent=19 // pred_region
          %s166 = sand.u32 %s61, 1
          %s167 = scalar_lea.sflag [#allocation6], %s166
          %s168 = sand.u32 %s61, 1
          %s169 = smul.addr %s168, 8
          %s170 = scalar_lea.vmem [#allocation5], %s169
          %s172 = ssub.s32 128, 128
          %173 = vsyncadd %s167, %s172
          %s174 = sadd.s32 %s24, %s23
          %s175 = smul.addr %s174, 128
          %s176 = scalar_lea.hbm %s1, %s175
          %s178 = sshll.u32 %s170, 4
          %s179 = int_to_ptr.vmem [resolvable:$true] %s178
          %181 = dma.hbm_to_vmem [thread:$0]  %s176, 128, %s179, %s167
        $region24: #{tpu_custom_call.1} parent=19 // pred_fallthru
          _
        // Predicated region
        $region25: #{tpu_custom_call.1} parent=19 // pred_check
          %p182 = pneg %p99
        $region26: #{tpu_custom_call.1} parent=19 // pred_check_branch
          %184 = sbr.rel (%p182) target = $region28
        $region27: #{tpu_custom_call.1} parent=19 // pred_region
          %p185 = scmp.lt.s32.totalorder %s23, 1
          %s186 = scalar_select %p185, %s23, 1
          %p187 = scmp.lt.s32.totalorder %s24, 0
          %s188 = scalar_select %p187, %s24, 0
          %s189 = sadd.s32 %s188, %s186
          %s190 = scalar_lea.vmem %s2, %s189
        $region28: #{tpu_custom_call.1} parent=19 // pred_fallthru
          _
      $region20: #{tpu_custom_call.1} parent=5 // pred_fallthru
        _
      %p191 = scmp.le.s32.totalorder 1, %s16
      %p192 = scmp.lt.s32.totalorder %s16, 3
      %p193 = pnand %p191, %p192
      %p194 = pneg %p193
      // Predicated region
      $region29: #{tpu_custom_call.1} parent=5 // pred_check
        _
      $region30: #{tpu_custom_call.1} parent=5 // pred_check_branch
        %196 = sbr.rel (%p193) target = $region32
      $region31: #{tpu_custom_call.1} parent=5 // pred_region
        %s197 = ssub.s32 %s16, 1
        // Predicated region
        $region33: #{tpu_custom_call.1} parent=31 // pred_check
          %p198 = pneg %p49
        $region34: #{tpu_custom_call.1} parent=31 // pred_check_branch
          %200 = sbr.rel (%p198) target = $region36
        $region35: #{tpu_custom_call.1} parent=31 // pred_region
          %201 = dma.done [#allocation3], 128
        $region36: #{tpu_custom_call.1} parent=31 // pred_fallthru
          _
        %s202 = sand.u32 %s64, 1
        %s203 = scalar_lea.sflag [#allocation6], %s202
        %s204 = sand.u32 %s64, 1
        %s205 = smul.addr %s204, 8
        %s206 = scalar_lea.vmem [#allocation5], %s205
        // Predicated region
        $region37: #{tpu_custom_call.1} parent=31 // pred_check
          %p207 = pneg %p77
        $region38: #{tpu_custom_call.1} parent=31 // pred_check_branch
          %209 = sbr.rel (%p207) target = $region40
        $region39: #{tpu_custom_call.1} parent=31 // pred_region
          %210 = dma.done %s203, 128
        $region40: #{tpu_custom_call.1} parent=31 // pred_fallthru
          _
        %p211 = pneg %p49
        %p212 = pneg %p46
        %s213 = sand.u32 %s64, 1
        %s214 = scalar_lea.sflag [#allocation6], %s213
        %s215 = sand.u32 %s64, 1
        %s216 = smul.addr %s215, 8
        %s217 = scalar_lea.vmem [#allocation5], %s216
        %p218 = pneg %p77
        %p219 = pneg %p74
        %p220 = scmp.lt.s32.totalorder %s25, 1
        %s221 = scalar_select %p220, %s25, 1
        %p222 = scmp.lt.s32.totalorder %s26, 0
        %s223 = scalar_select %p222, %s26, 0
        %s224 = sadd.s32 %s223, %s221
        %s225 = scalar_lea.vmem %s2, %s224
        %p226 = pneg %p105
        %p227 = pneg %p102
        %p228 = pneg %p133
        %p229 = pneg %p130
        %s230 = sand.u32 %s120, 1
        %s231 = scalar_lea.sflag [#allocation4], %s230
        %s232 = sand.u32 %s120, 1
        %s233 = smul.addr %s232, 8
        %s234 = scalar_lea.vmem [#allocation7], %s233
        %p235 = scmp.lt.s32.totalorder %s25, 1
        %s236 = scalar_select %p235, %s25, 1
        %p237 = scmp.lt.s32.totalorder %s26, 0
        %s238 = scalar_select %p237, %s26, 0
        %s239 = sadd.s32 %s238, %s236
        %s240 = scalar_lea.vmem %s2, %s239
        %v241 = vld [vmem:[%s206] sm:$0xff]
        %v242 = vld [vmem:[#allocation2] sm:$0xff]
        %vm243 = vcmask 64512
        %v245 = vsel %vm243, %v242, 0
        %247 = vmatprep.subr.mxu0 0.0
        %248 = vmatpush1.msra.mxu0 0.0
        %249 = vmatprep.subr.mxu0 0.0
        %250 = vmatpush1.msra.mxu0 0.0
        %251 = vmatprep.subr.mxu0 0.0
        %252 = vmatpush1.msra.mxu0 0.0
        %253 = vmatprep.subr.mxu0 0.0
        %254 = vmatpush1.msra.mxu0 0.0
        %255 = vmatprep.subr.mxu0 0.0
        %256 = vmatpush1.msra.mxu0 0.0
        %257 = vmatprep.subr.mxu0 0.0
        %258 = vmatpush1.msra.mxu0 0.0
        %259 = vmatprep.subr.mxu0 0.0
        %260 = vmatpush1.msra.mxu0 0.0
        %261 = vmatprep.subr.mxu0 0.0
        %262 = vmatpush1.msra.mxu0 0.0
        %263 = vmatprep.subr.mxu0 0.0
        %264 = vmatpush1.msra.mxu0 0.0
        %265 = vmatprep.subr.mxu0 0.0
        %266 = vmatpush1.msra.mxu0 0.0
        %267 = vmatprep.subr.mxu0 0.0
        %268 = vmatpush1.msra.mxu0 0.0
        %269 = vmatprep.subr.mxu0 0.0
        %270 = vmatpush1.msra.mxu0 0.0
        %271 = vmatprep.subr.mxu0 0.0
        %272 = vmatpush1.msra.mxu0 0.0
        %273 = vmatprep.subr.mxu0 0.0
        %274 = vmatpush1.msra.mxu0 0.0
        %275 = vmatprep.subr.mxu0 0.0
        %276 = vmatpush1.msra.mxu0 0.0
        %277 = vmatprep.subr.mxu0 0.0
        %278 = vmatpush1.msra.mxu0 %v241
        %279 = vmatprep.subr.mxu0 0.0
        %280 = vmatpush2.msra.mxu0 0.0
        %281 = vmatprep.subr.mxu0 0.0
        %282 = vmatpush2.msra.mxu0 0.0
        %283 = vmatprep.subr.mxu0 0.0
        %284 = vmatpush2.msra.mxu0 0.0
        %285 = vmatprep.subr.mxu0 0.0
        %286 = vmatpush2.msra.mxu0 0.0
        %287 = vmatprep.subr.mxu0 0.0
        %288 = vmatpush2.msra.mxu0 0.0
        %289 = vmatprep.subr.mxu0 0.0
        %290 = vmatpush2.msra.mxu0 0.0
        %291 = vmatprep.subr.mxu0 0.0
        %292 = vmatpush2.msra.mxu0 0.0
        %293 = vmatprep.subr.mxu0 0.0
        %294 = vmatpush2.msra.mxu0 0.0
        %295 = vmatprep.subr.mxu0 0.0
        %296 = vmatpush2.msra.mxu0 0.0
        %297 = vmatprep.subr.mxu0 0.0
        %298 = vmatpush2.msra.mxu0 0.0
        %299 = vmatprep.subr.mxu0 0.0
        %300 = vmatpush2.msra.mxu0 0.0
        %301 = vmatprep.subr.mxu0 0.0
        %302 = vmatpush2.msra.mxu0 0.0
        %303 = vmatprep.subr.mxu0 0.0
        %304 = vmatpush2.msra.mxu0 0.0
        %305 = vmatprep.subr.mxu0 0.0
        %306 = vmatpush2.msra.mxu0 0.0
        %307 = vmatprep.subr.mxu0 0.0
        %308 = vmatpush2.msra.mxu0 0.0
        %309 = vmatprep.subr.mxu0 0.0
        %310 = vmatpush2.msra.mxu0 0.0
        %311 = vmatprep.mubr.f32.mxu0 0.0
        %312 = vmatmul.mubr.f32.gmra.mxu0 %v245
        %v313 = vpop.f32.mrf.mxu0
        %v314 = vadd.f32 0.0, %v313
        %v315 = vpop.f32.mrf.mxu0
        %316 = vdwg.mxu0
        %v317 = vld [vmem:[%s240] sm:$0x1]
        %v319 = vlaneseq
        %v320 = vshrl.u32 %v319, 7
        %v321 = vsub.s32 0, %v320
        %v322 = vrot.slane %v317, %v321
        %v324 = vmul.f32 %v314, %v322
        %325 = vst [vmem:[%s234] sm:$0xff] %v324
        %s326 = sand.u32 %s120, 1
        %s327 = scalar_lea.sflag [#allocation4], %s326
        %s328 = sand.u32 %s120, 1
        %s329 = smul.addr %s328, 8
        %s330 = scalar_lea.vmem [#allocation7], %s329
        // Predicated region
        $region41: #{tpu_custom_call.1} parent=31 // pred_check
          %p331 = pneg %p130
        $region42: #{tpu_custom_call.1} parent=31 // pred_check_branch
          %333 = sbr.rel (%p331) target = $region44
        $region43: #{tpu_custom_call.1} parent=31 // pred_region
          %s335 = ssub.s32 128, 128
          %336 = vsyncadd %s327, %s335
          %s337 = sadd.s32 %s26, %s25
          %s338 = smul.addr %s337, 128
          %s339 = scalar_lea.hbm %s3, %s338
          %s341 = sshll.u32 %s330, 4
          %s342 = int_to_ptr.vmem [resolvable:$true] %s341
          %344 = dma.vmem_to_hbm [thread:$0]  %s342, 128, %s339, %s327
        $region44: #{tpu_custom_call.1} parent=31 // pred_fallthru
          _
      $region32: #{tpu_custom_call.1} parent=5 // pred_fallthru
        _
      %p345 = scmp.le.s32.totalorder 2, %s16
      // Predicated region
      $region45: #{tpu_custom_call.1} parent=5 // pred_check
        %p346 = pneg %p345
      $region46: #{tpu_custom_call.1} parent=5 // pred_check_branch
        %348 = sbr.rel (%p346) target = $region48
      $region47: #{tpu_custom_call.1} parent=5 // pred_region
        %s349 = ssub.s32 %s16, 2
        // Predicated region
        $region49: #{tpu_custom_call.1} parent=47 // pred_check
          %p350 = pneg %p136
        $region50: #{tpu_custom_call.1} parent=47 // pred_check_branch
          %352 = sbr.rel (%p350) target = $region52
        $region51: #{tpu_custom_call.1} parent=47 // pred_region
          %s353 = sand.u32 %s121, 1
          %s354 = scalar_lea.sflag [#allocation4], %s353
          %s355 = sand.u32 %s121, 1
          %s356 = smul.addr %s355, 8
          %s357 = scalar_lea.vmem [#allocation7], %s356
          %358 = dma.done %s354, 128
        $region52: #{tpu_custom_call.1} parent=47 // pred_fallthru
          _
      $region48: #{tpu_custom_call.1} parent=5 // pred_fallthru
        _
    $region6: #{tpu_custom_call.1} parent=1 // loop_footer
      %s20 = sadd.s32 1, %s16
    $region7: #{tpu_custom_call.1} parent=1 // loop_footer_branch
      %15 = sbr.rel target = $region3
    $region8: #{tpu_custom_call.1} parent=1 // loop_exit
      _
    %359 = vsyncpa [#allocation3], 1
    %s360 = scalar_lea.sflag [#allocation3], 1
    %361 = vsyncpa %s360, 1
    %362 = vsyncpa [#allocation6], 1
    %s363 = scalar_lea.sflag [#allocation6], 1
    %364 = vsyncpa %s363, 1
    %365 = vsyncpa [#allocation4], 1
    %s366 = scalar_lea.sflag [#allocation4], 1
    %367 = vsyncpa %s366, 1

</llo_original>
